<compile_context>
chip_gen: v6e
topology: v6e:2x2x1
jax: 0.10.0
libtpu: 0.0.40
codegen_flags: <defaults>
</compile_context>

<pallas_src>
import functools

import jax
import jax.numpy as jnp
import numpy as np
from jax import lax
from jax.experimental import pallas as pl
from jax.experimental.pallas import tpu as pltpu

KH = KW = 3          # kernel_size = 3
PAD = 1              # padding = 1
EPS = 1e-5           # BatchNorm2d default eps


def _fused_conv_bn_relu_kernel(lhs_ref, w_ref, b_ref, gamma_ref, beta_ref,
                               gsum_ref, o_ref, *, count):
    # lhs_ref   : (N*H, KH*W*Cin) bf16  row-shifted activation views, lane-dense
    # w_ref     : (KH*W*Cin, W*Cout) bf16  banded (Toeplitz-in-W) weights
    # b_ref     : (1, W*Cout) f32   conv bias tiled over W
    # gamma_ref : (1, W*Cout) f32   BN gamma tiled over W
    # beta_ref  : (1, W*Cout) f32   BN beta tiled over W
    # gsum_ref  : (W*Cout, W*Cout) f32  per-channel group-sum + broadcast matrix
    # o_ref     : (N*H, W*Cout)

    # 3x3 conv for the whole batch as ONE lane-dense MXU matmul (K = 3*W*Cin).
    # bf16 operands, f32 accumulation.
    acc = jnp.dot(lhs_ref[...], w_ref[...], preferred_element_type=jnp.float32)
    acc = acc + b_ref[...]                               # conv bias (f32)

    # Training-mode BatchNorm statistics over (N, H, W) per channel, all f32.
    # Column sums are (1, W*Cout); one tiny matmul with the constant gsum
    # matrix sums over the W groups per channel AND broadcasts the result back
    # to the W-tiled lane layout, so no cross-lane reshapes are needed.
    colsum = jnp.sum(acc, axis=0, keepdims=True)         # (1, W*Cout)
    colsq = jnp.sum(acc * acc, axis=0, keepdims=True)    # (1, W*Cout)
    s = jnp.dot(colsum, gsum_ref[...], preferred_element_type=jnp.float32)
    ss = jnp.dot(colsq, gsum_ref[...], preferred_element_type=jnp.float32)
    inv_count = 1.0 / count
    mean = s * inv_count
    var = jnp.maximum(ss * inv_count - mean * mean, 0.0)  # biased variance
    inv_std = lax.rsqrt(var + EPS)                        # EUP slot

    # Fused BN affine + ReLU epilogue; only the final result is written.
    scale = gamma_ref[...] * inv_std
    shift = beta_ref[...] - mean * scale
    o_ref[...] = jnp.maximum(acc * scale + shift, 0.0).astype(o_ref.dtype)


def _banded_weights(weight, W):
    """(KH, KW, Cin, Cout) -> (KH*W*Cin, W*Cout) banded weights.

    out[dy*W*Cin + wi*Cin + ci, wo*Cout + co] = weight[dy, wi-wo+PAD, ci, co]
    when 0 <= wi-wo+PAD < KW, else 0.  Dropped out-of-range horizontal taps
    are exactly the pad=1 zero-padding in W.
    """
    KH_, KW_, Cin, Cout = weight.shape
    band = np.zeros((KW_, W, W), dtype=np.float32)
    for dx in range(KW_):
        for wo in range(W):
            wi = wo + dx - PAD
            if 0 <= wi < W:
                band[dx, wi, wo] = 1.0
    band = jnp.asarray(band, dtype=weight.dtype)
    # wband[y, i, c, w, o] = sum_x weight[y, x, c, o] * band[x, i, w]
    wband = jnp.einsum('yxco,xiw->yicwo', weight, band)
    return wband.reshape(KH_ * W * Cin, W * Cout)


def _group_sum_matrix(W, Cout):
    """(W*Cout, W*Cout) 0/1 matrix: G[i, j] = (i % Cout == j % Cout)."""
    ch = np.arange(W * Cout) % Cout
    return jnp.asarray((ch[:, None] == ch[None, :]).astype(np.float32))


def conv_block_forward(x_nchw, weight, bias, gamma, beta):
    """x_nchw: (N, Cin, H, W); weight: (KH, KW, Cin, Cout); returns (N, Cout, H, W)."""
    N, Cin, H, W = x_nchw.shape
    Cout = weight.shape[-1]
    WCin, WCout = W * Cin, W * Cout
    M = N * H
    K = KH * WCin

    # NCHW -> lane-dense slab plus per-image row-shifted (vertical halo) views.
    # Layout plumbing only, no arithmetic; halo is per-image (no batch bleed).
    x_rows = jnp.transpose(x_nchw, (0, 2, 3, 1)).reshape(N, H, WCin)
    x_rows = x_rows.astype(jnp.float32)
    zrow = jnp.zeros((N, 1, WCin), jnp.float32)
    x_dn = jnp.concatenate([zrow, x_rows[:, :-1, :]], axis=1)   # row h -> x[h-1]
    x_up = jnp.concatenate([x_rows[:, 1:, :], zrow], axis=1)    # row h -> x[h+1]
    lhs = jnp.concatenate([x_dn, x_rows, x_up], axis=2)         # (N, H, 3*W*Cin)
    lhs = lhs.reshape(M, K).astype(jnp.bfloat16)                # MXU operand

    wfold = _banded_weights(weight, W).astype(jnp.bfloat16)     # (K, WCout)
    brow = jnp.tile(bias, W).reshape(1, WCout).astype(jnp.float32)
    grow = jnp.tile(gamma, W).reshape(1, WCout).astype(jnp.float32)
    berow = jnp.tile(beta, W).reshape(1, WCout).astype(jnp.float32)
    gsum = _group_sum_matrix(W, Cout)                           # (WCout, WCout)

    kernel = functools.partial(_fused_conv_bn_relu_kernel, count=float(N * H * W))

    # Honest cost of the banded formulation the kernel actually executes.
    flops = 2 * M * K * WCout + 2 * 2 * WCout * WCout + 8 * M * WCout
    bytes_accessed = (2 * M * K + 2 * K * WCout + 4 * WCout * WCout
                      + 3 * 4 * WCout + 4 * M * WCout)

    y2d = pl.pallas_call(
        kernel,
        # Whole batch in a single step: the fused BN needs the global view and
        # the entire working set (~140 KB) is far below every generation's
        # scoped VMEM (16 MiB v5e / 32 MiB v6e / 32 MiB v7x defaults).
        grid=(1,),
        in_specs=[
            pl.BlockSpec((M, K), lambda i: (0, 0)),
            pl.BlockSpec((K, WCout), lambda i: (0, 0)),
            pl.BlockSpec((1, WCout), lambda i: (0, 0)),
            pl.BlockSpec((1, WCout), lambda i: (0, 0)),
            pl.BlockSpec((1, WCout), lambda i: (0, 0)),
            pl.BlockSpec((WCout, WCout), lambda i: (0, 0)),
        ],
        out_specs=pl.BlockSpec((M, WCout), lambda i: (0, 0)),
        out_shape=jax.ShapeDtypeStruct((M, WCout), x_nchw.dtype),
        compiler_params=pltpu.CompilerParams(
            dimension_semantics=("arbitrary",)),
        cost_estimate=pl.CostEstimate(flops=flops, transcendentals=WCout,
                                      bytes_accessed=bytes_accessed),
    )(lhs, wfold, brow, grow, berow, gsum)

    return jnp.transpose(y2d.reshape(N, H, W, Cout), (0, 3, 1, 2))


def _reference(x_nchw, weight, bias, gamma, beta):
    # pure-JAX reference for verification
    w_oihw = jnp.transpose(weight, (3, 2, 0, 1))                 # (Cout, Cin, KH, KW)
    conv = lax.conv_general_dilated(
        x_nchw, w_oihw, window_strides=(1, 1), padding=((PAD, PAD), (PAD, PAD)),
        dimension_numbers=("NCHW", "OIHW", "NCHW"))
    conv = conv + bias[None, :, None, None]
    mean = jnp.mean(conv, axis=(0, 2, 3), keepdims=True)
    var = jnp.mean((conv - mean) ** 2, axis=(0, 2, 3), keepdims=True)
    y = (conv - mean) * lax.rsqrt(var + EPS)
    y = y * gamma[None, :, None, None] + beta[None, :, None, None]
    return jnp.maximum(y, 0.0)


if __name__ == "__main__":
    # small shapes consistent with conv_block(in_size=4, out_size=8)
    N, Cin, H, W, Cout = 2, 4, 16, 16, 8

    key = jax.random.PRNGKey(0)
    kx, kw, kb = jax.random.split(key, 3)
    x = jax.random.normal(kx, (N, Cin, H, W), dtype=jnp.float32)

    # deterministic parameter init (synthetic; PyTorch default BN affine = 1/0)
    weight = jax.random.normal(kw, (KH, KW, Cin, Cout), dtype=jnp.float32) * 0.1
    bias = jax.random.normal(kb, (Cout,), dtype=jnp.float32) * 0.1
    gamma = jnp.ones((Cout,), dtype=jnp.float32)
    beta = jnp.zeros((Cout,), dtype=jnp.float32)

    fwd = jax.jit(conv_block_forward)
    out = jax.block_until_ready(fwd(x, weight, bias, gamma, beta))

    ref = jax.block_until_ready(_reference(x, weight, bias, gamma, beta))
    # Tolerance reflects bf16 MXU operands (accumulation and BN math stay f32).
    np.testing.assert_allclose(np.asarray(out), np.asarray(ref),
                               rtol=1e-2, atol=1e-2)
    print("KERNEL_OK")
</pallas_src>

<mosaic_0001>
module attributes {stable_mosaic.version = 11 : i64} {
  func.func @_fused_conv_bn_relu_kernel(%arg0: i32, %arg1: memref<32x192xbf16, #tpu.memory_space<vmem>>, %arg2: memref<192x128xbf16, #tpu.memory_space<vmem>>, %arg3: memref<1x128xf32, #tpu.memory_space<vmem>>, %arg4: memref<1x128xf32, #tpu.memory_space<vmem>>, %arg5: memref<1x128xf32, #tpu.memory_space<vmem>>, %arg6: memref<128x128xf32, #tpu.memory_space<vmem>>, %arg7: memref<32x128xf32, #tpu.memory_space<vmem>>) attributes {dimension_semantics = [#tpu.dimension_semantics<arbitrary>], iteration_bounds = array<i64: 1>, scalar_prefetch = 0 : i64, scratch_operands = 0 : i64, tpu.core_type = #tpu.core_type<tc>, window_params = [{pipeline_mode = #tpu.pipeline_mode<synchronous>, transform_indices = @transform_0, window_bounds = array<i64: 32, 192>}, {pipeline_mode = #tpu.pipeline_mode<synchronous>, transform_indices = @transform_1, window_bounds = array<i64: 192, 128>}, {pipeline_mode = #tpu.pipeline_mode<synchronous>, transform_indices = @transform_2, window_bounds = array<i64: 1, 128>}, {pipeline_mode = #tpu.pipeline_mode<synchronous>, transform_indices = @transform_3, window_bounds = array<i64: 1, 128>}, {pipeline_mode = #tpu.pipeline_mode<synchronous>, transform_indices = @transform_4, window_bounds = array<i64: 1, 128>}, {pipeline_mode = #tpu.pipeline_mode<synchronous>, transform_indices = @transform_5, window_bounds = array<i64: 128, 128>}, {pipeline_mode = #tpu.pipeline_mode<synchronous>, transform_indices = @transform_6, window_bounds = array<i64: 32, 128>}]} {
    %c0 = arith.constant 0 : index
    %c0_0 = arith.constant 0 : index
    %0 = vector.load %arg1[%c0, %c0_0] : memref<32x192xbf16, #tpu.memory_space<vmem>>, vector<32x192xbf16>
    %c0_1 = arith.constant 0 : index
    %c0_2 = arith.constant 0 : index
    %1 = vector.load %arg2[%c0_1, %c0_2] : memref<192x128xbf16, #tpu.memory_space<vmem>>, vector<192x128xbf16>
    %cst = arith.constant dense<0.000000e+00> : vector<32x128xf32>
    %2 = tpu.matmul %0, %1, %cst {dimension_numbers = #tpu.dot_dimension_numbers<[1], [0], [0], [1], [0, 0, 1, 1], [], []>} : vector<32x192xbf16>, vector<192x128xbf16>, vector<32x128xf32> -> vector<32x128xf32>
    %c0_3 = arith.constant 0 : index
    %c0_4 = arith.constant 0 : index
    %3 = vector.load %arg3[%c0_3, %c0_4] : memref<1x128xf32, #tpu.memory_space<vmem>>, vector<1x128xf32>
    %4 = vector.broadcast %3 : vector<1x128xf32> to vector<32x128xf32>
    %5 = arith.addf %2, %4 : vector<32x128xf32>
    %cst_5 = arith.constant dense<0.000000e+00> : vector<128xf32>
    %6 = vector.multi_reduction <add>, %5, %cst_5 [0] : vector<32x128xf32> to vector<128xf32>
    %7 = vector.shape_cast %6 : vector<128xf32> to vector<1x128xf32>
    %8 = arith.mulf %5, %5 : vector<32x128xf32>
    %cst_6 = arith.constant dense<0.000000e+00> : vector<128xf32>
    %9 = vector.multi_reduction <add>, %8, %cst_6 [0] : vector<32x128xf32> to vector<128xf32>
    %10 = vector.shape_cast %9 : vector<128xf32> to vector<1x128xf32>
    %c0_7 = arith.constant 0 : index
    %c0_8 = arith.constant 0 : index
    %11 = vector.load %arg6[%c0_7, %c0_8] : memref<128x128xf32, #tpu.memory_space<vmem>>, vector<128x128xf32>
    %cst_9 = arith.constant dense<0.000000e+00> : vector<1x128xf32>
    %12 = tpu.matmul %7, %11, %cst_9 {dimension_numbers = #tpu.dot_dimension_numbers<[1], [0], [0], [1], [0, 0, 1, 1], [], []>} : vector<1x128xf32>, vector<128x128xf32>, vector<1x128xf32> -> vector<1x128xf32>
    %c0_10 = arith.constant 0 : index
    %c0_11 = arith.constant 0 : index
    %13 = vector.load %arg6[%c0_10, %c0_11] : memref<128x128xf32, #tpu.memory_space<vmem>>, vector<128x128xf32>
    %cst_12 = arith.constant dense<0.000000e+00> : vector<1x128xf32>
    %14 = tpu.matmul %10, %13, %cst_12 {dimension_numbers = #tpu.dot_dimension_numbers<[1], [0], [0], [1], [0, 0, 1, 1], [], []>} : vector<1x128xf32>, vector<128x128xf32>, vector<1x128xf32> -> vector<1x128xf32>
    %cst_13 = arith.constant 0.001953125 : f32
    %15 = vector.broadcast %cst_13 : f32 to vector<1x128xf32>
    %16 = arith.mulf %12, %15 : vector<1x128xf32>
    %cst_14 = arith.constant 0.001953125 : f32
    %17 = vector.broadcast %cst_14 : f32 to vector<1x128xf32>
    %18 = arith.mulf %14, %17 : vector<1x128xf32>
    %19 = arith.mulf %16, %16 : vector<1x128xf32>
    %20 = arith.subf %18, %19 : vector<1x128xf32>
    %cst_15 = arith.constant 0.000000e+00 : f32
    %21 = vector.broadcast %cst_15 : f32 to vector<1x128xf32>
    %22 = arith.maximumf %20, %21 : vector<1x128xf32>
    %cst_16 = arith.constant 9.99999974E-6 : f32
    %23 = vector.broadcast %cst_16 : f32 to vector<1x128xf32>
    %24 = arith.addf %22, %23 : vector<1x128xf32>
    %25 = math.rsqrt %24 : vector<1x128xf32>
    %c0_17 = arith.constant 0 : index
    %c0_18 = arith.constant 0 : index
    %26 = vector.load %arg4[%c0_17, %c0_18] : memref<1x128xf32, #tpu.memory_space<vmem>>, vector<1x128xf32>
    %27 = arith.mulf %26, %25 : vector<1x128xf32>
    %c0_19 = arith.constant 0 : index
    %c0_20 = arith.constant 0 : index
    %28 = vector.load %arg5[%c0_19, %c0_20] : memref<1x128xf32, #tpu.memory_space<vmem>>, vector<1x128xf32>
    %29 = arith.mulf %16, %27 : vector<1x128xf32>
    %30 = arith.subf %28, %29 : vector<1x128xf32>
    %31 = vector.broadcast %27 : vector<1x128xf32> to vector<32x128xf32>
    %32 = arith.mulf %5, %31 : vector<32x128xf32>
    %33 = vector.broadcast %30 : vector<1x128xf32> to vector<32x128xf32>
    %34 = arith.addf %32, %33 : vector<32x128xf32>
    %cst_21 = arith.constant 0.000000e+00 : f32
    %35 = vector.broadcast %cst_21 : f32 to vector<32x128xf32>
    %36 = arith.maximumf %34, %35 : vector<32x128xf32>
    %c0_22 = arith.constant 0 : index
    %c0_23 = arith.constant 0 : index
    %37 = vector.load %arg7[%c0_22, %c0_23] : memref<32x128xf32, #tpu.memory_space<vmem>>, vector<32x128xf32>
    tpu.vector_store %arg7[%c0_22, %c0_23], %36 {strides = array<i32>} : memref<32x128xf32, #tpu.memory_space<vmem>>, vector<32x128xf32>,
    return
  }
  func.func @transform_0(%arg0: i32) -> (i32, i32) {
    %c0_i32 = arith.constant 0 : i32
    %c0_i32_0 = arith.constant 0 : i32
    %c0_i32_1 = arith.constant 0 : i32
    return %c0_i32, %c0_i32_0 : i32, i32
  }
  func.func @transform_1(%arg0: i32) -> (i32, i32) {
    %c0_i32 = arith.constant 0 : i32
    %c0_i32_0 = arith.constant 0 : i32
    %c0_i32_1 = arith.constant 0 : i32
    return %c0_i32, %c0_i32_0 : i32, i32
  }
  func.func @transform_2(%arg0: i32) -> (i32, i32) {
    %c0_i32 = arith.constant 0 : i32
    %c0_i32_0 = arith.constant 0 : i32
    %c0_i32_1 = arith.constant 0 : i32
    return %c0_i32, %c0_i32_0 : i32, i32
  }
  func.func @transform_3(%arg0: i32) -> (i32, i32) {
    %c0_i32 = arith.constant 0 : i32
    %c0_i32_0 = arith.constant 0 : i32
    %c0_i32_1 = arith.constant 0 : i32
    return %c0_i32, %c0_i32_0 : i32, i32
  }
  func.func @transform_4(%arg0: i32) -> (i32, i32) {
    %c0_i32 = arith.constant 0 : i32
    %c0_i32_0 = arith.constant 0 : i32
    %c0_i32_1 = arith.constant 0 : i32
    return %c0_i32, %c0_i32_0 : i32, i32
  }
  func.func @transform_5(%arg0: i32) -> (i32, i32) {
    %c0_i32 = arith.constant 0 : i32
    %c0_i32_0 = arith.constant 0 : i32
    %c0_i32_1 = arith.constant 0 : i32
    return %c0_i32, %c0_i32_0 : i32, i32
  }
  func.func @transform_6(%arg0: i32) -> (i32, i32) {
    %c0_i32 = arith.constant 0 : i32
    %c0_i32_0 = arith.constant 0 : i32
    %c0_i32_1 = arith.constant 0 : i32
    return %c0_i32, %c0_i32_0 : i32, i32
  }
}

</mosaic_0001>

<llo_original>
// kernel: tile.18
$region0: #{tile.18}
  #allocation0 [shape = 's32[1]{0}', space=sflag, size = 0x4, scoped, tag = 'scoped memory for tile.18']
  %s0 = inlined_call_operand.vmem [shape: f32[8], index: 0, kind: input, shape index: {}]
  %s1 = inlined_call_operand.vmem [shape: f32[16,8], index: 1, kind: output, shape index: {}]
  // Predicated region
  $region2: #{tile.18} parent=0 // pred_check
    _
  $region3: #{tile.18} parent=0 // pred_check_branch
    %3 = sbr.rel (0) target = $region5
  $region4: #{tile.18} parent=0 // pred_region
    _
  $region5: #{tile.18} parent=0 // pred_fallthru
    _
  %v4 = vld [vmem:[%s0] ss:$0 sm:$0xff]
  %5 = vst [vmem:[%s1] sm:$0xff] %v4
  %s6 = scalar_lea.vmem %s1, 8
  %7 = vst [vmem:[%s6] sm:$0xff] %v4

// kernel: tile.19
$region0: #{tile.19}
  %s0 = inlined_call_operand.vmem [shape: f32[16,8], index: 0, kind: input, shape index: {}]
  %s1 = inlined_call_operand.vmem [shape: f32[1,128], index: 1, kind: output, shape index: {}]
  $region1: #{tile.19} parent=0
    #allocation0 [shape = 'u8[4096]{0}', space=vmem, size = 0x1000, scoped, tag = 'scoped mem for output reshape']
    %v2 = vld [vmem:[%s0] sm:$0x1]
    %vm3 = vcmask 64512
    %4 = vst.msk [vmem:[#allocation0] sm:$0x1] %vm3, %v2
    %s5 = scalar_lea.vmem %s0, 15
    %v6 = vld [vmem:[%s5] sm:$0x1]
    %7 = vrot.lane.b32.xlu0 %v6, 120
    %v8 = vpop.permute.xlu0 %7
    %vm9 = vcmask 1048512
    %10 = vst.msk [vmem:[#allocation0] sm:$0x1] %vm9, %v8
    %s11 = scalar_lea.vmem %s0, 14
    %v12 = vld [vmem:[%s11] sm:$0x1]
    %13 = vrot.lane.b32.xlu0 %v12, 112
    %v14 = vpop.permute.xlu0 %13
    %vm15 = vcmask 982912
    %16 = vst.msk [vmem:[#allocation0] sm:$0x1] %vm15, %v14
    %s17 = scalar_lea.vmem %s0, 13
    %v18 = vld [vmem:[%s17] sm:$0x1]
    %19 = vrot.lane.b32.xlu0 %v18, 104
    %v20 = vpop.permute.xlu0 %19
    %vm21 = vcmask 917312
    %22 = vst.msk [vmem:[#allocation0] sm:$0x1] %vm21, %v20
    %s23 = scalar_lea.vmem %s0, 12
    %v24 = vld [vmem:[%s23] sm:$0x1]
    %25 = vrot.lane.b32.xlu0 %v24, 96
    %v26 = vpop.permute.xlu0 %25
    %vm27 = vcmask 851712
    %28 = vst.msk [vmem:[#allocation0] sm:$0x1] %vm27, %v26
    %s29 = scalar_lea.vmem %s0, 11
    %v30 = vld [vmem:[%s29] sm:$0x1]
    %31 = vrot.lane.b32.xlu0 %v30, 88
    %v32 = vpop.permute.xlu0 %31
    %vm33 = vcmask 786112
    %34 = vst.msk [vmem:[#allocation0] sm:$0x1] %vm33, %v32
    %s35 = scalar_lea.vmem %s0, 10
    %v36 = vld [vmem:[%s35] sm:$0x1]
    %37 = vrot.lane.b32.xlu0 %v36, 80
    %v38 = vpop.permute.xlu0 %37
    %vm39 = vcmask 720512
    %40 = vst.msk [vmem:[#allocation0] sm:$0x1] %vm39, %v38
    %s41 = scalar_lea.vmem %s0, 9
    %v42 = vld [vmem:[%s41] sm:$0x1]
    %43 = vrot.lane.b32.xlu0 %v42, 72
    %v44 = vpop.permute.xlu0 %43
    %vm45 = vcmask 654912
    %46 = vst.msk [vmem:[#allocation0] sm:$0x1] %vm45, %v44
    %s47 = scalar_lea.vmem %s0, 8
    %v48 = vld [vmem:[%s47] sm:$0x1]
    %49 = vrot.lane.b32.xlu0 %v48, 64
    %v50 = vpop.permute.xlu0 %49
    %vm51 = vcmask 589312
    %52 = vst.msk [vmem:[#allocation0] sm:$0x1] %vm51, %v50
    %s53 = scalar_lea.vmem %s0, 7
    %v54 = vld [vmem:[%s53] sm:$0x1]
    %55 = vrot.lane.b32.xlu0 %v54, 56
    %v56 = vpop.permute.xlu0 %55
    %vm57 = vcmask 523712
    %58 = vst.msk [vmem:[#allocation0] sm:$0x1] %vm57, %v56
    %s59 = scalar_lea.vmem %s0, 6
    %v60 = vld [vmem:[%s59] sm:$0x1]
    %61 = vrot.lane.b32.xlu0 %v60, 48
    %v62 = vpop.permute.xlu0 %61
    %vm63 = vcmask 458112
    %64 = vst.msk [vmem:[#allocation0] sm:$0x1] %vm63, %v62
    %s65 = scalar_lea.vmem %s0, 5
    %v66 = vld [vmem:[%s65] sm:$0x1]
    %67 = vrot.lane.b32.xlu0 %v66, 40
    %v68 = vpop.permute.xlu0 %67
    %vm69 = vcmask 392512
    %70 = vst.msk [vmem:[#allocation0] sm:$0x1] %vm69, %v68
    %s71 = scalar_lea.vmem %s0, 4
    %v72 = vld [vmem:[%s71] sm:$0x1]
    %73 = vrot.lane.b32.xlu0 %v72, 32
    %v74 = vpop.permute.xlu0 %73
    %vm75 = vcmask 326912
    %76 = vst.msk [vmem:[#allocation0] sm:$0x1] %vm75, %v74
    %s77 = scalar_lea.vmem %s0, 3
    %v78 = vld [vmem:[%s77] sm:$0x1]
    %79 = vrot.lane.b32.xlu0 %v78, 24
    %v80 = vpop.permute.xlu0 %79
    %vm81 = vcmask 261312
    %82 = vst.msk [vmem:[#allocation0] sm:$0x1] %vm81, %v80
    %s83 = scalar_lea.vmem %s0, 2
    %v84 = vld [vmem:[%s83] sm:$0x1]
    %85 = vrot.lane.b32.xlu0 %v84, 16
    %v86 = vpop.permute.xlu0 %85
    %vm87 = vcmask 195712
    %88 = vst.msk [vmem:[#allocation0] sm:$0x1] %vm87, %v86
    %s89 = scalar_lea.vmem %s0, 1
    %v90 = vld [vmem:[%s89] sm:$0x1]
    %91 = vrot.lane.b32.xlu0 %v90, 8
    %v92 = vpop.permute.xlu0 %91
    %vm93 = vcmask 130112
    %94 = vst.msk [vmem:[#allocation0] sm:$0x1] %vm93, %v92
    %s96 = sshll.u32 1, 1
    %s97 = ssub.s32 %s96, 1
    %v99 = vld [vmem:[#allocation0] sm:%s97]
    %s100 = sshll.u32 1, 1
    %s101 = ssub.s32 %s100, 1
    %102 = vst [vmem:[%s1] sm:%s101] %v99

// kernel: conv_block_forward.1
$region0: #{conv_block_forward.1}
  #allocation0 [shape = 'u32[]', space=smem, size = 0x4, offset = 0x4, fixed_abs, tag = 'smem constant byte address 0x4 - core index']
  #allocation1 [shape = 'u32[144,128]{1,0:T(1,128)}', space=vmem, size = 0x12000, scoped, tag = 'internal scratch']
  %s0 = inlined_call_operand.vmem [shape: bf16[32,192], index: 0, kind: input, shape index: {}]
  %s1 = inlined_call_operand.vmem [shape: bf16[192,128], index: 1, kind: input, shape index: {}]
  %s2 = inlined_call_operand.vmem [shape: f32[1,128], index: 2, kind: input, shape index: {}]
  %s3 = inlined_call_operand.vmem [shape: f32[1,128], index: 3, kind: input, shape index: {}]
  %s4 = inlined_call_operand.vmem [shape: f32[1,128], index: 4, kind: input, shape index: {}]
  %s5 = inlined_call_operand.vmem [shape: f32[128,128], index: 5, kind: input, shape index: {}]
  %s6 = inlined_call_operand.vmem [shape: f32[32,128], index: 6, kind: output, shape index: {}]
  %s7 = sld [smem:[#allocation0]]
  $region34: #{conv_block_forward.1} parent=0
    _
  %s9 = ssub.s32 1, %s7
  %s10 = scalar_select 0, %s9, %s7
  // Predicated region
  $region2: #{conv_block_forward.1} parent=0 // pred_check
    _
  $region3: #{conv_block_forward.1} parent=0 // pred_check_branch
    %12 = sbr.rel (0) target = $region5
  $region4: #{conv_block_forward.1} parent=0 // pred_region
    _
  $region5: #{conv_block_forward.1} parent=0 // pred_fallthru
    _
  // Predicated region
  $region6: #{conv_block_forward.1} parent=0 // pred_check
    _
  $region7: #{conv_block_forward.1} parent=0 // pred_check_branch
    %14 = sbr.rel (0) target = $region9
  $region8: #{conv_block_forward.1} parent=0 // pred_region
    _
  $region9: #{conv_block_forward.1} parent=0 // pred_fallthru
    _
  // Predicated region
  $region10: #{conv_block_forward.1} parent=0 // pred_check
    _
  $region11: #{conv_block_forward.1} parent=0 // pred_check_branch
    %16 = sbr.rel (0) target = $region13
  $region12: #{conv_block_forward.1} parent=0 // pred_region
    _
  $region13: #{conv_block_forward.1} parent=0 // pred_fallthru
    _
  // Predicated region
  $region14: #{conv_block_forward.1} parent=0 // pred_check
    _
  $region15: #{conv_block_forward.1} parent=0 // pred_check_branch
    %18 = sbr.rel (0) target = $region17
  $region16: #{conv_block_forward.1} parent=0 // pred_region
    _
  $region17: #{conv_block_forward.1} parent=0 // pred_fallthru
    _
  // Predicated region
  $region18: #{conv_block_forward.1} parent=0 // pred_check
    _
  $region19: #{conv_block_forward.1} parent=0 // pred_check_branch
    %20 = sbr.rel (0) target = $region21
  $region20: #{conv_block_forward.1} parent=0 // pred_region
    _
  $region21: #{conv_block_forward.1} parent=0 // pred_fallthru
    _
  // Predicated region
  $region22: #{conv_block_forward.1} parent=0 // pred_check
    _
  $region23: #{conv_block_forward.1} parent=0 // pred_check_branch
    %22 = sbr.rel (0) target = $region25
  $region24: #{conv_block_forward.1} parent=0 // pred_region
    _
  $region25: #{conv_block_forward.1} parent=0 // pred_fallthru
    _
  %v24 = vld [vmem:[%s0] sm:$0xff]
  %v25 = vld [vmem:[%s0 + $0x8] sm:$0xff]
  %v26 = vld [vmem:[%s0 + $0x10] sm:$0xff]
  %v27 = vld [vmem:[%s0 + $0x18] sm:$0xff]
  %v28 = vld [vmem:[%s1] sm:$0xf]
  %v29 = vld [vmem:[%s1 + $0x4] sm:$0xf]
  %v30 = vld [vmem:[%s1 + $0x8] sm:$0xf]
  %v31 = vld [vmem:[%s1 + $0xc] sm:$0xf]
  %v32 = vld [vmem:[%s1 + $0x10] sm:$0xf]
  %v33 = vld [vmem:[%s1 + $0x14] sm:$0xf]
  %v34 = vld [vmem:[%s1 + $0x18] sm:$0xf]
  %v35 = vld [vmem:[%s1 + $0x1c] sm:$0xf]
  %v36 = vld [vmem:[%s1 + $0x20] sm:$0xf]
  %v37 = vld [vmem:[%s1 + $0x24] sm:$0xf]
  %v38 = vld [vmem:[%s1 + $0x28] sm:$0xf]
  %v39 = vld [vmem:[%s1 + $0x2c] sm:$0xf]
  %v40 = vld [vmem:[%s1 + $0x30] sm:$0xf]
  %v41 = vld [vmem:[%s1 + $0x34] sm:$0xf]
  %v42 = vld [vmem:[%s1 + $0x38] sm:$0xf]
  %v43 = vld [vmem:[%s1 + $0x3c] sm:$0xf]
  %v44 = vld [vmem:[%s1 + $0x40] sm:$0xf]
  %v45 = vld [vmem:[%s1 + $0x44] sm:$0xf]
  %v46 = vld [vmem:[%s1 + $0x48] sm:$0xf]
  %v47 = vld [vmem:[%s1 + $0x4c] sm:$0xf]
  %v48 = vld [vmem:[%s1 + $0x50] sm:$0xf]
  %v49 = vld [vmem:[%s1 + $0x54] sm:$0xf]
  %v50 = vld [vmem:[%s1 + $0x58] sm:$0xf]
  %v51 = vld [vmem:[%s1 + $0x5c] sm:$0xf]
  %v52 = vld [vmem:[%s2] sm:$0x1]
  %v54 = vlaneseq
  %v55 = vshrl.u32 %v54, 7
  %v56 = vsub.s32 0, %v55
  %v57 = vrot.slane %v52, %v56
  %v63 = vunpack.c.l.b16 %v24
  %v64 = vunpack.c.h.b16 %v24
  %v65 = vunpack.c.l.b16 %v25
  %v66 = vunpack.c.h.b16 %v25
  %v67 = vunpack.c.l.b16 %v26
  %v68 = vunpack.c.h.b16 %v26
  %v69 = vunpack.c.l.b16 %v27
  %v70 = vunpack.c.h.b16 %v27
  %v71 = vpack.c.b16 %v65, %v63
  %v72 = vpack.c.b16 %v66, %v64
  %v73 = vpack.c.b16 %v69, %v67
  %v74 = vpack.c.b16 %v70, %v68
  %v101 = vunpack.c.l.b16 %v28
  %v102 = vunpack.c.l.b16 %v29
  %v103 = vunpack.c.l.b16 %v30
  %v104 = vunpack.c.l.b16 %v31
  %v105 = vunpack.c.l.b16 %v32
  %v106 = vunpack.c.l.b16 %v33
  %v107 = vunpack.c.l.b16 %v34
  %v108 = vunpack.c.l.b16 %v35
  %v109 = vunpack.c.l.b16 %v36
  %v110 = vunpack.c.l.b16 %v37
  %v111 = vunpack.c.l.b16 %v38
  %v112 = vunpack.c.l.b16 %v39
  %v113 = vunpack.c.l.b16 %v40
  %v114 = vunpack.c.l.b16 %v41
  %v115 = vunpack.c.l.b16 %v42
  %v116 = vunpack.c.l.b16 %v43
  %v117 = vunpack.c.l.b16 %v44
  %v118 = vunpack.c.l.b16 %v45
  %v119 = vunpack.c.l.b16 %v46
  %v120 = vunpack.c.l.b16 %v47
  %v121 = vunpack.c.l.b16 %v48
  %v122 = vunpack.c.l.b16 %v49
  %v123 = vunpack.c.l.b16 %v50
  %v124 = vunpack.c.l.b16 %v51
  %v125 = vpack.c.b16 %v102, %v101
  %v126 = vpack.c.b16 %v104, %v103
  %v127 = vpack.c.b16 %v106, %v105
  %v128 = vpack.c.b16 %v108, %v107
  %v129 = vpack.c.b16 %v110, %v109
  %v130 = vpack.c.b16 %v112, %v111
  %v131 = vpack.c.b16 %v114, %v113
  %v132 = vpack.c.b16 %v116, %v115
  %v133 = vpack.c.b16 %v118, %v117
  %v134 = vpack.c.b16 %v120, %v119
  %v135 = vpack.c.b16 %v122, %v121
  %v136 = vpack.c.b16 %v124, %v123
  %vm149 = vcmask 523264
  %v151 = vsel %vm149, %v72, 0
  %v154 = vsel %vm149, %v74, 0
  %156 = vmatprep.subr.bf16.mxu0 0
  %157 = vmatpush1.bf16.msra.mxu0 %v132
  %158 = vmatprep.subr.bf16.mxu0 0
  %159 = vmatpush1.bf16.msra.mxu0 %v131
  %160 = vmatprep.subr.bf16.mxu0 0
  %161 = vmatpush1.bf16.msra.mxu0 %v130
  %162 = vmatprep.subr.bf16.mxu0 0
  %163 = vmatpush1.bf16.msra.mxu0 %v129
  %164 = vmatprep.subr.bf16.mxu0 0
  %165 = vmatpush1.bf16.msra.mxu0 %v128
  %166 = vmatprep.subr.bf16.mxu0 0
  %167 = vmatpush1.bf16.msra.mxu0 %v127
  %168 = vmatprep.subr.bf16.mxu0 0
  %169 = vmatpush1.bf16.msra.mxu0 %v126
  %170 = vmatprep.subr.bf16.mxu0 0
  %171 = vmatpush1.bf16.msra.mxu0 %v125
  %172 = vmatprep.subr.bf16.mxu0 0
  %173 = vmatpush2.bf16.msra.mxu0 0
  %174 = vmatprep.subr.bf16.mxu0 0
  %175 = vmatpush2.bf16.msra.mxu0 0
  %176 = vmatprep.subr.bf16.mxu0 0
  %177 = vmatpush2.bf16.msra.mxu0 0
  %178 = vmatprep.subr.bf16.mxu0 0
  %179 = vmatpush2.bf16.msra.mxu0 0
  %180 = vmatprep.subr.bf16.mxu0 0
  %181 = vmatpush2.bf16.msra.mxu0 %v136
  %182 = vmatprep.subr.bf16.mxu0 0
  %183 = vmatpush2.bf16.msra.mxu0 %v135
  %184 = vmatprep.subr.bf16.mxu0 0
  %185 = vmatpush2.bf16.msra.mxu0 %v134
  %186 = vmatprep.subr.bf16.mxu0 0
  %187 = vmatpush2.bf16.msra.mxu0 %v133
  %188 = vmatprep.mubr.bf16.mxu0 %v151
  %189 = vmatmul.mubr.bf16.gmra.mxu0 %v71
  %v190 = vpop.f32.mrf.mxu0
  %v191 = vadd.f32 %v57, %v190
  %v192 = vpop.f32.mrf.mxu0
  %v193 = vpop.f32.mrf.mxu0
  %v194 = vadd.f32 %v57, %v193
  %v195 = vpop.f32.mrf.mxu0
  %196 = vmatprep.mubr.bf16.mxu0 %v154
  %197 = vmatmul.mubr.bf16.gmra.mxu0 %v73
  %v198 = vpop.f32.mrf.mxu0
  %v199 = vadd.f32 %v57, %v198
  %v200 = vpop.f32.mrf.mxu0
  %v201 = vpop.f32.mrf.mxu0
  %v202 = vadd.f32 %v57, %v201
  %v203 = vpop.f32.mrf.mxu0
  %204 = vdwg.mxu0
  %v205 = vadd.f32 %v191, %v194
  %v206 = vadd.f32 %v205, %v199
  %v207 = vadd.f32 %v206, %v202
  %v208 = vrot.slane %v207, 4
  %v209 = vadd.f32 %v207, %v208
  %v210 = vrot.slane %v209, 2
  %v211 = vadd.f32 %v209, %v210
  %v212 = vrot.slane %v211, 1
  %v213 = vadd.f32 %v211, %v212
  %v214 = vmul.f32 %v191, %v191
  %v215 = vmul.f32 %v194, %v194
  %v216 = vmul.f32 %v199, %v199
  %v217 = vmul.f32 %v202, %v202
  %v218 = vadd.f32 %v214, %v215
  %v219 = vadd.f32 %v218, %v216
  %v220 = vadd.f32 %v219, %v217
  %v221 = vrot.slane %v220, 4
  %v222 = vadd.f32 %v220, %v221
  %v223 = vrot.slane %v222, 2
  %v224 = vadd.f32 %v222, %v223
  %v225 = vrot.slane %v224, 1
  %v226 = vadd.f32 %v224, %v225
  %v227 = vld [vmem:[%s5] sm:$0xff]
  %v228 = vld [vmem:[%s5 + $0x8] sm:$0xff]
  %v229 = vld [vmem:[%s5 + $0x10] sm:$0xff]
  %v230 = vld [vmem:[%s5 + $0x18] sm:$0xff]
  %v231 = vld [vmem:[%s5 + $0x20] sm:$0xff]
  %v232 = vld [vmem:[%s5 + $0x28] sm:$0xff]
  %v233 = vld [vmem:[%s5 + $0x30] sm:$0xff]
  %v234 = vld [vmem:[%s5 + $0x38] sm:$0xff]
  %v235 = vld [vmem:[%s5 + $0x40] sm:$0xff]
  %v236 = vld [vmem:[%s5 + $0x48] sm:$0xff]
  %v237 = vld [vmem:[%s5 + $0x50] sm:$0xff]
  %v238 = vld [vmem:[%s5 + $0x58] sm:$0xff]
  %v239 = vld [vmem:[%s5 + $0x60] sm:$0xff]
  %v240 = vld [vmem:[%s5 + $0x68] sm:$0xff]
  %v241 = vld [vmem:[%s5 + $0x70] sm:$0xff]
  %v242 = vld [vmem:[%s5 + $0x78] sm:$0xff]
  %243 = vmatprep.subr.mxu0 0.0
  %244 = vmatpush1.msra.mxu0 %v242
  %245 = vmatprep.subr.mxu0 0.0
  %246 = vmatpush1.msra.mxu0 %v241
  %247 = vmatprep.subr.mxu0 0.0
  %248 = vmatpush1.msra.mxu0 %v240
  %249 = vmatprep.subr.mxu0 0.0
  %250 = vmatpush1.msra.mxu0 %v239
  %251 = vmatprep.subr.mxu0 0.0
  %252 = vmatpush1.msra.mxu0 %v238
  %253 = vmatprep.subr.mxu0 0.0
  %254 = vmatpush1.msra.mxu0 %v237
  %255 = vmatprep.subr.mxu0 0.0
  %256 = vmatpush1.msra.mxu0 %v236
  %257 = vmatprep.subr.mxu0 0.0
  %258 = vmatpush1.msra.mxu0 %v235
  %259 = vmatprep.subr.mxu0 0.0
  %260 = vmatpush1.msra.mxu0 %v234
  %261 = vmatprep.subr.mxu0 0.0
  %262 = vmatpush1.msra.mxu0 %v233
  %263 = vmatprep.subr.mxu0 0.0
  %264 = vmatpush1.msra.mxu0 %v232
  %265 = vmatprep.subr.mxu0 0.0
  %266 = vmatpush1.msra.mxu0 %v231
  %267 = vmatprep.subr.mxu0 0.0
  %268 = vmatpush1.msra.mxu0 %v230
  %269 = vmatprep.subr.mxu0 0.0
  %270 = vmatpush1.msra.mxu0 %v229
  %271 = vmatprep.subr.mxu0 0.0
  %272 = vmatpush1.msra.mxu0 %v228
  %273 = vmatprep.subr.mxu0 0.0
  %274 = vmatpush1.msra.mxu0 %v227
  %275 = vmatprep.subr.mxu0 0.0
  %276 = vmatpush2.msra.mxu0 0.0
  %277 = vmatprep.subr.mxu0 0.0
  %278 = vmatpush2.msra.mxu0 0.0
  %279 = vmatprep.subr.mxu0 0.0
  %280 = vmatpush2.msra.mxu0 0.0
  %281 = vmatprep.subr.mxu0 0.0
  %282 = vmatpush2.msra.mxu0 0.0
  %283 = vmatprep.subr.mxu0 0.0
  %284 = vmatpush2.msra.mxu0 0.0
  %285 = vmatprep.subr.mxu0 0.0
  %286 = vmatpush2.msra.mxu0 0.0
  %287 = vmatprep.subr.mxu0 0.0
  %288 = vmatpush2.msra.mxu0 0.0
  %289 = vmatprep.subr.mxu0 0.0
  %290 = vmatpush2.msra.mxu0 0.0
  %291 = vmatprep.subr.mxu0 0.0
  %292 = vmatpush2.msra.mxu0 0.0
  %293 = vmatprep.subr.mxu0 0.0
  %294 = vmatpush2.msra.mxu0 0.0
  %295 = vmatprep.subr.mxu0 0.0
  %296 = vmatpush2.msra.mxu0 0.0
  %297 = vmatprep.subr.mxu0 0.0
  %298 = vmatpush2.msra.mxu0 0.0
  %299 = vmatprep.subr.mxu0 0.0
  %300 = vmatpush2.msra.mxu0 0.0
  %301 = vmatprep.subr.mxu0 0.0
  %302 = vmatpush2.msra.mxu0 0.0
  %303 = vmatprep.subr.mxu0 0.0
  %304 = vmatpush2.msra.mxu0 0.0
  %305 = vmatprep.subr.mxu0 0.0
  %306 = vmatpush2.msra.mxu0 0.0
  %307 = vmatprep.mubr.f32.mxu0 0.0
  %308 = vmatmul.mubr.f32.gmra.mxu0 %v213
  %v309 = vpop.f32.mrf.mxu0
  %v310 = vadd.f32 0.0, %v309
  %v311 = vpop.f32.mrf.mxu0
  %312 = vdwg.mxu0
  %313 = vmatprep.subr.mxu0 0.0
  %314 = vmatpush1.msra.mxu0 %v242
  %315 = vmatprep.subr.mxu0 0.0
  %316 = vmatpush1.msra.mxu0 %v241
  %317 = vmatprep.subr.mxu0 0.0
  %318 = vmatpush1.msra.mxu0 %v240
  %319 = vmatprep.subr.mxu0 0.0
  %320 = vmatpush1.msra.mxu0 %v239
  %321 = vmatprep.subr.mxu0 0.0
  %322 = vmatpush1.msra.mxu0 %v238
  %323 = vmatprep.subr.mxu0 0.0
  %324 = vmatpush1.msra.mxu0 %v237
  %325 = vmatprep.subr.mxu0 0.0
  %326 = vmatpush1.msra.mxu0 %v236
  %327 = vmatprep.subr.mxu0 0.0
  %328 = vmatpush1.msra.mxu0 %v235
  %329 = vmatprep.subr.mxu0 0.0
  %330 = vmatpush1.msra.mxu0 %v234
  %331 = vmatprep.subr.mxu0 0.0
  %332 = vmatpush1.msra.mxu0 %v233
  %333 = vmatprep.subr.mxu0 0.0
  %334 = vmatpush1.msra.mxu0 %v232
  %335 = vmatprep.subr.mxu0 0.0
  %336 = vmatpush1.msra.mxu0 %v231
  %337 = vmatprep.subr.mxu0 0.0
  %338 = vmatpush1.msra.mxu0 %v230
  %339 = vmatprep.subr.mxu0 0.0
  %340 = vmatpush1.msra.mxu0 %v229
  %341 = vmatprep.subr.mxu0 0.0
  %342 = vmatpush1.msra.mxu0 %v228
  %343 = vmatprep.subr.mxu0 0.0
  %344 = vmatpush1.msra.mxu0 %v227
  %345 = vmatprep.subr.mxu0 0.0
  %346 = vmatpush2.msra.mxu0 0.0
  %347 = vmatprep.subr.mxu0 0.0
  %348 = vmatpush2.msra.mxu0 0.0
  %349 = vmatprep.subr.mxu0 0.0
  %350 = vmatpush2.msra.mxu0 0.0
  %351 = vmatprep.subr.mxu0 0.0
  %352 = vmatpush2.msra.mxu0 0.0
  %353 = vmatprep.subr.mxu0 0.0
  %354 = vmatpush2.msra.mxu0 0.0
  %355 = vmatprep.subr.mxu0 0.0
  %356 = vmatpush2.msra.mxu0 0.0
  %357 = vmatprep.subr.mxu0 0.0
  %358 = vmatpush2.msra.mxu0 0.0
  %359 = vmatprep.subr.mxu0 0.0
  %360 = vmatpush2.msra.mxu0 0.0
  %361 = vmatprep.subr.mxu0 0.0
  %362 = vmatpush2.msra.mxu0 0.0
  %363 = vmatprep.subr.mxu0 0.0
  %364 = vmatpush2.msra.mxu0 0.0
  %365 = vmatprep.subr.mxu0 0.0
  %366 = vmatpush2.msra.mxu0 0.0
  %367 = vmatprep.subr.mxu0 0.0
  %368 = vmatpush2.msra.mxu0 0.0
  %369 = vmatprep.subr.mxu0 0.0
  %370 = vmatpush2.msra.mxu0 0.0
  %371 = vmatprep.subr.mxu0 0.0
  %372 = vmatpush2.msra.mxu0 0.0
  %373 = vmatprep.subr.mxu0 0.0
  %374 = vmatpush2.msra.mxu0 0.0
  %375 = vmatprep.subr.mxu0 0.0
  %376 = vmatpush2.msra.mxu0 0.0
  %377 = vmatprep.mubr.f32.mxu0 0.0
  %378 = vmatmul.mubr.f32.gmra.mxu0 %v226
  %v379 = vpop.f32.mrf.mxu0
  %v380 = vadd.f32 0.0, %v379
  %v381 = vpop.f32.mrf.mxu0
  %382 = vdwg.mxu0
  %v383 = vmul.f32 %v310, 0.001953125
  %v384 = vmul.f32 %v380, 0.001953125
  %v385 = vmul.f32 %v383, %v383
  %v386 = vsub.f32 %v384, %v385
  %v387 = vmax.f32 %v386, 0.0
  %v388 = vadd.f32 %v387, 1e-05
  %v389 = vrsqrt.pop %v388
  %v390 = vld [vmem:[%s3] sm:$0x1]
  %v391 = vmul.f32 %v390, %v389
  %v392 = vld [vmem:[%s4] sm:$0x1]
  %v393 = vmul.f32 %v383, %v391
  %v394 = vsub.f32 %v392, %v393
  %v396 = vlaneseq
  %v397 = vshrl.u32 %v396, 7
  %v398 = vsub.s32 0, %v397
  %v399 = vrot.slane %v391, %v398
  %v401 = vmul.f32 %v191, %v399
  %v402 = vmul.f32 %v194, %v399
  %v403 = vmul.f32 %v199, %v399
  %v404 = vmul.f32 %v202, %v399
  %v406 = vlaneseq
  %v407 = vshrl.u32 %v406, 7
  %v408 = vsub.s32 0, %v407
  %v409 = vrot.slane %v394, %v408
  %v411 = vadd.f32 %v401, %v409
  %v412 = vadd.f32 %v402, %v409
  %v413 = vadd.f32 %v403, %v409
  %v414 = vadd.f32 %v404, %v409
  %v415 = vmax.f32 %v411, 0.0
  %v416 = vmax.f32 %v412, 0.0
  %v417 = vmax.f32 %v413, 0.0
  %v418 = vmax.f32 %v414, 0.0
  %419 = vst [vmem:[%s6] sm:$0xff] %v415
  %420 = vst [vmem:[%s6 + $0x8] sm:$0xff] %v416
  %421 = vst [vmem:[%s6 + $0x10] sm:$0xff] %v417
  %422 = vst [vmem:[%s6 + $0x18] sm:$0xff] %v418
  // Predicated region
  $region26: #{conv_block_forward.1} parent=0 // pred_check
    _
  $region27: #{conv_block_forward.1} parent=0 // pred_check_branch
    %424 = sbr.rel (0) target = $region29
  $region28: #{conv_block_forward.1} parent=0 // pred_region
    _
  $region29: #{conv_block_forward.1} parent=0 // pred_fallthru
    _
  // Predicated region
  $region30: #{conv_block_forward.1} parent=0 // pred_check
    _
  $region31: #{conv_block_forward.1} parent=0 // pred_check_branch
    %426 = sbr.rel (0) target = $region33
  $region32: #{conv_block_forward.1} parent=0 // pred_region
    _
  $region33: #{conv_block_forward.1} parent=0 // pred_fallthru
    _

</llo_original>
